<compile_context>
chip_gen: v5e
topology: v5e:2x2
jax: 0.10.0
libtpu: 0.0.40
codegen_flags: <defaults>
</compile_context>

<pallas_src>
import functools

import jax
import jax.numpy as jnp
from jax.experimental import pallas as pl
from jax.experimental.pallas import tpu as pltpu

EPS = 1e-6
BLOCK_BYTES = 4 << 20          # ~4 MiB blocks: mem-bound sweet spot on v6e/v7x
VMEM_LIMIT_BYTES = 32 << 20    # explicit: 2x(in+out) 4 MiB buffers + residents,
                               # below v7x's 64 MiB physical, raises v5e's 16 MiB default


# ------------------------- tiling helpers (host-side) ------------------------
def _choose_hw_tile(C, HW, itemsize, budget_bytes=BLOCK_BYTES):
    """Largest HW tile (multiple of 128, dividing HW) with (C, tile) <= budget."""
    row_bytes = max(1, C * itemsize)
    max_cols = max(1, budget_bytes // row_bytes)
    if max_cols >= HW:
        return HW                                  # full extent: always legal
    if HW % 128 != 0:
        # TODO(synk): HW has no 128-multiple divisor; fall back to full-HW
        # blocks (correct; only oversized for very large non-aligned images).
        return HW
    t = max(128, (max_cols // 128) * 128)
    while t > 128 and HW % t != 0:
        t -= 128
    return t                                       # 128 always divides HW here


def _choose_batch_tile(N, C, hw_t, itemsize, budget_bytes=BLOCK_BYTES):
    """Largest batch tile (dividing N) with (bn, C, hw_t) <= budget."""
    block_bytes = max(1, C * hw_t * itemsize)
    bn = max(1, min(N, budget_bytes // block_bytes))
    while N % bn != 0:
        bn -= 1
    return bn


# ------------------------------- kernels --------------------------------------
def _stats_kernel(x_ref, sum_ref, sumsq_ref):
    """Fused per-channel sum / sum-of-squares.

    x block: (1, C, hw_t).  Outputs (1, C, 1) are per-sample partial sums:
    they act as accumulators across the (arbitrary) HW grid axis while the
    leading batch axis is 'parallel' (v7x: init split across both TCs).
    """
    k = pl.program_id(1)

    @pl.when(k == 0)
    def _():
        sum_ref[...] = jnp.zeros_like(sum_ref)
        sumsq_ref[...] = jnp.zeros_like(sumsq_ref)

    x = x_ref[...].astype(jnp.float32)                     # (1, C, hw_t)
    sum_ref[...] += jnp.sum(x, axis=-1, keepdims=True)     # (1, C, 1)
    sumsq_ref[...] += jnp.sum(x * x, axis=-1, keepdims=True)


def _apply_kernel(x_ref, scale_ref, shift_ref, o_ref):
    """out = x * scale + shift with per-channel (C, 1) resident scale/shift."""
    x = x_ref[...].astype(jnp.float32)                     # (bn, C, hw_t)
    scale = scale_ref[...][None]                           # (1, C, 1)
    shift = shift_ref[...][None]
    o_ref[...] = (x * scale + shift).astype(o_ref.dtype)


# ------------------------------- wrappers --------------------------------------
def actnorm_init_stats(x):
    """x: (N, C, H, W) -> (log_scale, scale, shift), each (C,) float32."""
    N, C, H, W = x.shape
    HW = H * W
    x3 = x.reshape(N, C, HW)                      # free reshape of contiguous NCHW
    hw_t = _choose_hw_tile(C, HW, x.dtype.itemsize)
    grid = (N, HW // hw_t)
    bytes_x = N * C * HW * x.dtype.itemsize

    col_out_spec = pl.BlockSpec((1, C, 1), lambda n, k: (n, 0, 0))
    psum, psumsq = pl.pallas_call(
        _stats_kernel,
        out_shape=(jax.ShapeDtypeStruct((N, C, 1), jnp.float32),
                   jax.ShapeDtypeStruct((N, C, 1), jnp.float32)),
        grid_spec=pltpu.PrefetchScalarGridSpec(
            num_scalar_prefetch=0, grid=grid,
            in_specs=[pl.BlockSpec((1, C, hw_t), lambda n, k: (n, 0, k))],
            out_specs=[col_out_spec, col_out_spec]),
        compiler_params=pltpu.CompilerParams(
            dimension_semantics=("parallel", "arbitrary"),
            vmem_limit_bytes=VMEM_LIMIT_BYTES),
        cost_estimate=pl.CostEstimate(flops=3 * N * C * HW, transcendentals=0,
                                      bytes_accessed=bytes_x + 8 * N * C),
    )(x3)

    # Tiny (C,)-sized finalize in plain jnp (init-only path).
    inv_count = 1.0 / float(N * HW)
    s = jnp.sum(psum[:, :, 0], axis=0)                     # (C,)
    ss = jnp.sum(psumsq[:, :, 0], axis=0)                  # (C,)
    mean = s * inv_count
    var = jnp.maximum(ss * inv_count - mean * mean, 0.0)
    # log(1/sqrt(var+eps)) == -0.5*log(var+eps); clamp(max=0)
    log_scale = jnp.minimum(-0.5 * jnp.log(var + EPS), 0.0)
    scale = jnp.exp(log_scale)
    shift = -mean * scale
    return log_scale, scale, shift


def actnorm_apply(x3, scale_col, shift_col, *, donate=False):
    """x3: (N, C, HW); scale_col/shift_col: (C, 1) f32 -> (N, C, HW) in x3.dtype."""
    N, C, HW = x3.shape
    itemsize = x3.dtype.itemsize
    hw_t = _choose_hw_tile(C, HW, itemsize)
    bn = _choose_batch_tile(N, C, hw_t, itemsize)
    grid = (N // bn, HW // hw_t)

    x_spec = pl.BlockSpec((bn, C, hw_t), lambda i, k: (i, 0, k))
    # Constant index_map => scale/shift stay resident in VMEM; no per-step DMA.
    col_spec = pl.BlockSpec((C, 1), lambda i, k: (0, 0))

    return pl.pallas_call(
        _apply_kernel,
        out_shape=jax.ShapeDtypeStruct((N, C, HW), x3.dtype),
        grid_spec=pltpu.PrefetchScalarGridSpec(
            num_scalar_prefetch=0, grid=grid,
            in_specs=[x_spec, col_spec, col_spec],
            out_specs=x_spec),
        compiler_params=pltpu.CompilerParams(
            dimension_semantics=("parallel", "parallel"),
            vmem_limit_bytes=VMEM_LIMIT_BYTES),
        input_output_aliases=({0: 0} if donate else {}),
        cost_estimate=pl.CostEstimate(
            flops=2 * N * C * HW, transcendentals=0,
            bytes_accessed=2 * N * C * HW * itemsize + 8 * C),
    )(x3, scale_col, shift_col)


# ------------------------------- module ----------------------------------------
class ActNormLP2D:
    """JAX/Pallas port of the PyTorch ActNormLP2D (data-dependent first-call init).

    NOTE: `_init` is Python-side state, matching eager PyTorch behaviour; it is
    not jax.jit/scan safe (the init branch would be baked in at trace time).
    """

    def __init__(self, num_channels):
        self.num_channels = num_channels
        self._log_scale = jnp.zeros((num_channels,), jnp.float32)
        self._shift = jnp.zeros((num_channels,), jnp.float32)
        # Cached per-channel (C, 1) columns used by the hot apply path.
        self._scale_col = jnp.ones((num_channels, 1), jnp.float32)   # exp(log_scale)
        self._shift_col = jnp.zeros((num_channels, 1), jnp.float32)
        self._init = False

    def __call__(self, x):
        N, C, H, W = x.shape
        assert C == self.num_channels

        if not self._init:
            log_scale, scale, shift = actnorm_init_stats(x)
            self._log_scale = log_scale
            self._shift = shift
            self._scale_col = scale.reshape(C, 1)
            self._shift_col = shift.reshape(C, 1)
            self._init = True

        # Free reshape of contiguous NCHW; no HBM round-trip transposes and no
        # per-call rebuilding of broadcast scale/shift.
        x3 = x.reshape(N, C, H * W)
        out3 = actnorm_apply(x3, self._scale_col, self._shift_col)
        return out3.reshape(N, C, H, W)


# ------------------------------ reference / test --------------------------------
def _reference(x):
    # Pure-JAX mirror of the PyTorch forward (init path).
    N, C, H, W = x.shape
    xc = jnp.transpose(x, (1, 0, 2, 3)).reshape(C, -1)
    mean = xc.mean(axis=1)
    zero_mean = x - mean[None, :, None, None]
    var = jnp.transpose(zero_mean ** 2, (1, 0, 2, 3)).reshape(C, -1).mean(axis=1)
    std = jnp.sqrt(var + EPS)
    log_scale = jnp.minimum(jnp.log(1.0 / std), 0.0)
    shift = -mean * jnp.exp(log_scale)
    return x * jnp.exp(log_scale)[None, :, None, None] + shift[None, :, None, None]


if __name__ == "__main__":
    key = jax.random.PRNGKey(0)
    N, C, H, W = 2, 4, 16, 16
    x = jax.random.normal(key, (N, C, H, W), dtype=jnp.float32) * 2.5 + 1.0

    module = ActNormLP2D(C)
    out = jax.block_until_ready(module(x))          # init + apply
    out2 = jax.block_until_ready(module(x))         # cached (hot) apply path
    ref = _reference(x)

    assert out.shape == (N, C, H, W)
    assert jnp.allclose(out, ref, atol=2e-5, rtol=1e-5), \
        float(jnp.max(jnp.abs(out - ref)))
    assert jnp.allclose(out2, out, atol=1e-6, rtol=1e-6)
    print("KERNEL_OK")
</pallas_src>

<mosaic_0001>
module attributes {stable_mosaic.version = 11 : i64} {
  func.func @_stats_kernel(%arg0: i32, %arg1: i32, %arg2: memref<1x4x256xf32, #tpu.memory_space<vmem>>, %arg3: memref<1x4x1xf32, #tpu.memory_space<vmem>>, %arg4: memref<1x4x1xf32, #tpu.memory_space<vmem>>) attributes {dimension_semantics = [#tpu.dimension_semantics<parallel>, #tpu.dimension_semantics<arbitrary>], iteration_bounds = array<i64: 2, 1>, scalar_prefetch = 0 : i64, scratch_operands = 0 : i64, tpu.core_type = #tpu.core_type<tc>, window_params = [{transform_indices = @transform_0, window_bounds = array<i64: 1, 4, 256>}, {transform_indices = @transform_1, window_bounds = array<i64: 1, 4, 1>}, {transform_indices = @transform_2, window_bounds = array<i64: 1, 4, 1>}]} {
    %c0_i32 = arith.constant 0 : i32
    %0 = arith.cmpi eq, %arg1, %c0_i32 : i32
    %1 = arith.extui %0 : i1 to i32
    %c0_i32_0 = arith.constant 0 : i32
    %2 = arith.cmpi ne, %1, %c0_i32_0 : i32
    scf.if %2 {
      %cst_16 = arith.constant 0.000000e+00 : f32
      %15 = vector.broadcast %cst_16 : f32 to vector<1x4x1xf32>
      %c0_17 = arith.constant 0 : index
      %c0_18 = arith.constant 0 : index
      %c0_19 = arith.constant 0 : index
      %16 = vector.load %arg3[%c0_17, %c0_18, %c0_19] : memref<1x4x1xf32, #tpu.memory_space<vmem>>, vector<1x4x1xf32>
      tpu.vector_store %arg3[%c0_17, %c0_18, %c0_19], %15 {strides = array<i32>} : memref<1x4x1xf32, #tpu.memory_space<vmem>>, vector<1x4x1xf32>,
      %cst_20 = arith.constant 0.000000e+00 : f32
      %17 = vector.broadcast %cst_20 : f32 to vector<1x4x1xf32>
      %c0_21 = arith.constant 0 : index
      %c0_22 = arith.constant 0 : index
      %c0_23 = arith.constant 0 : index
      %18 = vector.load %arg4[%c0_21, %c0_22, %c0_23] : memref<1x4x1xf32, #tpu.memory_space<vmem>>, vector<1x4x1xf32>
      tpu.vector_store %arg4[%c0_21, %c0_22, %c0_23], %17 {strides = array<i32>} : memref<1x4x1xf32, #tpu.memory_space<vmem>>, vector<1x4x1xf32>,
    } else {
    }
    %c0 = arith.constant 0 : index
    %c0_1 = arith.constant 0 : index
    %c0_2 = arith.constant 0 : index
    %3 = vector.load %arg2[%c0, %c0_1, %c0_2] : memref<1x4x256xf32, #tpu.memory_space<vmem>>, vector<1x4x256xf32>
    %c0_3 = arith.constant 0 : index
    %c0_4 = arith.constant 0 : index
    %c0_5 = arith.constant 0 : index
    %4 = vector.load %arg3[%c0_3, %c0_4, %c0_5] : memref<1x4x1xf32, #tpu.memory_space<vmem>>, vector<1x4x1xf32>
    %cst = arith.constant dense<0.000000e+00> : vector<1x4xf32>
    %5 = vector.multi_reduction <add>, %3, %cst [2] : vector<1x4x256xf32> to vector<1x4xf32>
    %6 = vector.shape_cast %5 : vector<1x4xf32> to vector<1x4x1xf32>
    %7 = arith.addf %4, %6 : vector<1x4x1xf32>
    %c0_6 = arith.constant 0 : index
    %c0_7 = arith.constant 0 : index
    %c0_8 = arith.constant 0 : index
    %8 = vector.load %arg3[%c0_6, %c0_7, %c0_8] : memref<1x4x1xf32, #tpu.memory_space<vmem>>, vector<1x4x1xf32>
    tpu.vector_store %arg3[%c0_6, %c0_7, %c0_8], %7 {strides = array<i32>} : memref<1x4x1xf32, #tpu.memory_space<vmem>>, vector<1x4x1xf32>,
    %c0_9 = arith.constant 0 : index
    %c0_10 = arith.constant 0 : index
    %c0_11 = arith.constant 0 : index
    %9 = vector.load %arg4[%c0_9, %c0_10, %c0_11] : memref<1x4x1xf32, #tpu.memory_space<vmem>>, vector<1x4x1xf32>
    %10 = arith.mulf %3, %3 : vector<1x4x256xf32>
    %cst_12 = arith.constant dense<0.000000e+00> : vector<1x4xf32>
    %11 = vector.multi_reduction <add>, %10, %cst_12 [2] : vector<1x4x256xf32> to vector<1x4xf32>
    %12 = vector.shape_cast %11 : vector<1x4xf32> to vector<1x4x1xf32>
    %13 = arith.addf %9, %12 : vector<1x4x1xf32>
    %c0_13 = arith.constant 0 : index
    %c0_14 = arith.constant 0 : index
    %c0_15 = arith.constant 0 : index
    %14 = vector.load %arg4[%c0_13, %c0_14, %c0_15] : memref<1x4x1xf32, #tpu.memory_space<vmem>>, vector<1x4x1xf32>
    tpu.vector_store %arg4[%c0_13, %c0_14, %c0_15], %13 {strides = array<i32>} : memref<1x4x1xf32, #tpu.memory_space<vmem>>, vector<1x4x1xf32>,
    return
  }
  func.func @transform_0(%arg0: i32, %arg1: i32) -> (i32, i32, i32) {
    %c0_i32 = arith.constant 0 : i32
    %c0_i32_0 = arith.constant 0 : i32
    return %arg0, %c0_i32, %arg1 : i32, i32, i32
  }
  func.func @transform_1(%arg0: i32, %arg1: i32) -> (i32, i32, i32) {
    %c0_i32 = arith.constant 0 : i32
    %c0_i32_0 = arith.constant 0 : i32
    %c0_i32_1 = arith.constant 0 : i32
    return %arg0, %c0_i32, %c0_i32_0 : i32, i32, i32
  }
  func.func @transform_2(%arg0: i32, %arg1: i32) -> (i32, i32, i32) {
    %c0_i32 = arith.constant 0 : i32
    %c0_i32_0 = arith.constant 0 : i32
    %c0_i32_1 = arith.constant 0 : i32
    return %arg0, %c0_i32, %c0_i32_0 : i32, i32, i32
  }
}

</mosaic_0001>

<llo_original>
// kernel: tpu_custom_call.1
$region0: #{tpu_custom_call.1}
  #allocation0 [shape = 'u32[]', space=smem, size = 0x4, offset = 0x4, fixed_abs, tag = 'smem constant byte address 0x4 - core index']
  #allocation1 [shape = 'u32[72,128]{1,0:T(1,128)}', space=vmem, size = 0x9000, scoped, tag = 'internal scratch']
  %s0 = inlined_call_operand.hbm [shape: f32[2,4,256], index: 0, kind: input, shape index: {}]
  %s1 = inlined_call_operand.vmem [shape: f32[2,4,1], index: 1, kind: output, shape index: {0}]
  %s2 = inlined_call_operand.vmem [shape: f32[2,4,1], index: 2, kind: output, shape index: {1}]
  %3 = xla_tuple %s1, %s2
  %s4 = sld [smem:[#allocation0]]
  $region53: #{tpu_custom_call.1} parent=0
    _
  %s6 = ssub.s32 1, %s4
  %s7 = scalar_select 0, %s6, %s4
  $region1: #{tpu_custom_call.1} parent=0
    #allocation2 [shape = 'u8[8192]{0}', space=vmem, size = 0x2000, scoped, tag = 'input window, operand 0']
    #allocation3 [shape = 's32[2]{0}', space=sflag, size = 0x8, scoped, tag = 'scoped memory for tpu_custom_call.1']
    %8 = vsyncpa [#allocation3], 0
    %s9 = scalar_lea.sflag [#allocation3], 1
    %10 = vsyncpa %s9, 0
    loop: start=0, step=1, limit=4
    $region2: #{tpu_custom_call.1} parent=1 // loop_pre_header
      _
    $region3: #{tpu_custom_call.1} parent=1 // loop_header
      %s12 = sphi 0, %s16
      %p13 = scmp.ge.s32.totalorder %s12, 4
      %s19 = sphi 0, %s31
      %s20 = sphi 0, %s27
      %s21 = sphi 0, %s19
      %s22 = sphi 0, %s20
      %s23 = sphi 0, %s21
      %s24 = sphi 0, %s22
      %s36 = sphi 0, %s38
      %s39 = sphi 0, %s36
      %s40 = sphi 0, %s39
      %s56 = sphi 0, %s40
      %s62 = sphi 0, %s64
      %s65 = sphi 0, %s62
      %s66 = sphi 0, %s65
      %s82 = sphi 0, %s66
      %s88 = sphi 0, %s90
      %s91 = sphi 0, %s88
      %s92 = sphi 0, %s91
      %s108 = sphi 0, %s92
    $region4: #{tpu_custom_call.1} parent=1 // loop_header_branch
      %15 = sbr.rel (%p13) target = $region8
    $region5: #{tpu_custom_call.1} parent=1 // loop_body
      %s17 = ssub.s32 %s12, 1
      %s18 = ssub.s32 %s12, 2
      %s25 = sadd.s32 1, %s20
      %p26 = scmp.ge.s32.totalorder %s25, 1
      %s27 = scalar_select %p26, 0, %s25
      %s28 = sadd.s32 1, %s19
      %s29 = scalar_select %p26, %s28, %s19
      %p30 = scmp.ge.s32.totalorder %s29, 2
      %s31 = scalar_select %p30, 0, %s29
      %s32 = ssub.s32 %s19, %s31
      %s33 = ssub.s32 %s20, %s27
      %s34 = sor.u32 %s32, %s33
      %p35 = scmp.eq.s32.totalorder %s34, 0
      %s37 = sadd.s32 %s36, 1
      %s38 = scalar_select %p35, %s36, %s37
      %p41 = pneg %p35
      %p42 = scmp.eq.s32.totalorder %s12, 1
      %p43 = por %p41, %p42
      %p44 = scmp.ne.s32.totalorder %s36, %s39
      %p45 = scmp.eq.s32.totalorder %s12, 0
      %p46 = por %p44, %p45
      %p47 = scmp.ne.s32.totalorder %s36, %s39
      %p48 = scmp.eq.s32.totalorder %s17, 1
      %p49 = por %p47, %p48
      %p50 = scmp.ne.s32.totalorder %s39, %s40
      %p51 = scmp.eq.s32.totalorder %s17, 0
      %p52 = por %p50, %p51
      %p53 = scmp.ne.s32.totalorder %s39, %s40
      %p54 = scmp.eq.s32.totalorder %s18, 1
      %p55 = por %p53, %p54
      %p57 = scmp.ne.s32.totalorder %s40, %s56
      %p58 = scmp.eq.s32.totalorder %s18, 0
      %p59 = por %p57, %p58
      %s60 = ssub.s32 %s19, %s31
      %p61 = scmp.eq.s32.totalorder %s60, 0
      %s63 = sadd.s32 %s62, 1
      %s64 = scalar_select %p61, %s62, %s63
      %p67 = pneg %p61
      %p68 = scmp.eq.s32.totalorder %s12, 1
      %p69 = por %p67, %p68
      %p70 = scmp.ne.s32.totalorder %s62, %s65
      %p71 = scmp.eq.s32.totalorder %s12, 0
      %p72 = por %p70, %p71
      %p73 = scmp.ne.s32.totalorder %s62, %s65
      %p74 = scmp.eq.s32.totalorder %s17, 1
      %p75 = por %p73, %p74
      %p76 = scmp.ne.s32.totalorder %s65, %s66
      %p77 = scmp.eq.s32.totalorder %s17, 0
      %p78 = por %p76, %p77
      %p79 = scmp.ne.s32.totalorder %s65, %s66
      %p80 = scmp.eq.s32.totalorder %s18, 1
      %p81 = por %p79, %p80
      %p83 = scmp.ne.s32.totalorder %s66, %s82
      %p84 = scmp.eq.s32.totalorder %s18, 0
      %p85 = por %p83, %p84
      %s86 = ssub.s32 %s19, %s31
      %p87 = scmp.eq.s32.totalorder %s86, 0
      %s89 = sadd.s32 %s88, 1
      %s90 = scalar_select %p87, %s88, %s89
      %p93 = pneg %p87
      %p94 = scmp.eq.s32.totalorder %s12, 1
      %p95 = por %p93, %p94
      %p96 = scmp.ne.s32.totalorder %s88, %s91
      %p97 = scmp.eq.s32.totalorder %s12, 0
      %p98 = por %p96, %p97
      %p99 = scmp.ne.s32.totalorder %s88, %s91
      %p100 = scmp.eq.s32.totalorder %s17, 1
      %p101 = por %p99, %p100
      %p102 = scmp.ne.s32.totalorder %s91, %s92
      %p103 = scmp.eq.s32.totalorder %s17, 0
      %p104 = por %p102, %p103
      %p105 = scmp.ne.s32.totalorder %s91, %s92
      %p106 = scmp.eq.s32.totalorder %s18, 1
      %p107 = por %p105, %p106
      %p109 = scmp.ne.s32.totalorder %s92, %s108
      %p110 = scmp.eq.s32.totalorder %s18, 0
      %p111 = por %p109, %p110
      %p112 = scmp.le.s32.totalorder 1, %s12
      %p113 = scmp.lt.s32.totalorder %s12, 3
      %p114 = pnand %p112, %p113
      %p115 = pneg %p114
      // Predicated region
      $region9: #{tpu_custom_call.1} parent=5 // pred_check
        _
      $region10: #{tpu_custom_call.1} parent=5 // pred_check_branch
        %117 = sbr.rel (%p114) target = $region12
      $region11: #{tpu_custom_call.1} parent=5 // pred_region
        %s118 = ssub.s32 %s12, 1
      $region12: #{tpu_custom_call.1} parent=5 // pred_fallthru
        _
      %p119 = scmp.lt.s32.totalorder %s12, 2
      // Predicated region
      $region13: #{tpu_custom_call.1} parent=5 // pred_check
        %p120 = pneg %p119
      $region14: #{tpu_custom_call.1} parent=5 // pred_check_branch
        %122 = sbr.rel (%p120) target = $region16
      $region15: #{tpu_custom_call.1} parent=5 // pred_region
        // Predicated region
        $region17: #{tpu_custom_call.1} parent=15 // pred_check
          %p123 = pneg %p46
        $region18: #{tpu_custom_call.1} parent=15 // pred_check_branch
          %125 = sbr.rel (%p123) target = $region20
        $region19: #{tpu_custom_call.1} parent=15 // pred_region
          %s126 = sand.u32 %s36, 1
          %s127 = scalar_lea.sflag [#allocation3], %s126
          %s128 = sand.u32 %s36, 1
          %s129 = smul.addr %s128, 8
          %s130 = scalar_lea.vmem [#allocation2], %s129
          %s131 = smul.u32 2, %s20
          %133 = vsyncadd %s127, 0
          %s134 = smul.addr %s19, 2
          %s135 = sadd.s32 %s131, %s134
          %s136 = smul.addr %s135, 4
          %s137 = scalar_lea.hbm %s0, %s136
          %s139 = sshll.u32 %s137, 4
          %s140 = int_to_ptr.hbm [resolvable:$true] %s139
          %s141 = sshll.u32 %s130, 4
          %s142 = int_to_ptr.vmem [resolvable:$true] %s141
          %144 = dma.hbm_to_vmem [thread:$0]  %s140, 128, %s142, %s127
        $region20: #{tpu_custom_call.1} parent=15 // pred_fallthru
          _
      $region16: #{tpu_custom_call.1} parent=5 // pred_fallthru
        _
      %p145 = scmp.le.s32.totalorder 1, %s12
      %p146 = scmp.lt.s32.totalorder %s12, 3
      %p147 = pnand %p145, %p146
      %p148 = pneg %p147
      // Predicated region
      $region21: #{tpu_custom_call.1} parent=5 // pred_check
        _
      $region22: #{tpu_custom_call.1} parent=5 // pred_check_branch
        %150 = sbr.rel (%p147) target = $region24
      $region23: #{tpu_custom_call.1} parent=5 // pred_region
        %s151 = ssub.s32 %s12, 1
        %s152 = sand.u32 %s39, 1
        %s153 = scalar_lea.sflag [#allocation3], %s152
        %s154 = sand.u32 %s39, 1
        %s155 = smul.addr %s154, 8
        %s156 = scalar_lea.vmem [#allocation2], %s155
        // Predicated region
        $region25: #{tpu_custom_call.1} parent=23 // pred_check
          %p157 = pneg %p52
        $region26: #{tpu_custom_call.1} parent=23 // pred_check_branch
          %159 = sbr.rel (%p157) target = $region28
        $region27: #{tpu_custom_call.1} parent=23 // pred_region
          %161 = dma.done %s153, 128
        $region28: #{tpu_custom_call.1} parent=23 // pred_fallthru
          _
        %s162 = sand.u32 %s39, 1
        %s163 = scalar_lea.sflag [#allocation3], %s162
        %s164 = sand.u32 %s39, 1
        %s165 = smul.addr %s164, 8
        %s166 = scalar_lea.vmem [#allocation2], %s165
        %p167 = pneg %p52
        %p168 = pneg %p49
        %p169 = pneg %p78
        %p170 = pneg %p75
        %p171 = scmp.lt.s32.totalorder %s21, 1
        %s172 = scalar_select %p171, %s21, 1
        %s173 = smul.addr %s172, 4
        %s174 = scalar_lea.vmem %s1, %s173
        %p175 = pneg %p104
        %p176 = pneg %p101
        %p177 = scmp.lt.s32.totalorder %s21, 1
        %s178 = scalar_select %p177, %s21, 1
        %s179 = smul.addr %s178, 4
        %s180 = scalar_lea.vmem %s2, %s179
        %s181 = smul.u32 2, %s22
        %p182 = scmp.lt.s32.totalorder %s21, 1
        %s183 = scalar_select %p182, %s21, 1
        %s184 = smul.addr %s183, 4
        %s185 = scalar_lea.vmem %s1, %s184
        %p186 = scmp.lt.s32.totalorder %s21, 1
        %s187 = scalar_select %p186, %s21, 1
        %s188 = smul.addr %s187, 4
        %s189 = scalar_lea.vmem %s2, %s188
        %p190 = scmp.eq.s32.totalorder %s22, 0
        // Predicated region
        $region29: #{tpu_custom_call.1} parent=23 // pred_check
          %p191 = pneg %p190
        $region30: #{tpu_custom_call.1} parent=23 // pred_check_branch
          %193 = sbr.rel (%p191) target = $region32
        $region31: #{tpu_custom_call.1} parent=23 // pred_region
          %vm194 = vcmask 3072
          %195 = vst.msk [vmem:[%s185] sm:$0xf] %vm194, 0.0
          %196 = vst.msk [vmem:[%s189] sm:$0xf] %vm194, 0.0
        $region32: #{tpu_custom_call.1} parent=23 // pred_fallthru
          _
        %v197 = vld [vmem:[%s156] sm:$0xff]
        %v198 = vld [vmem:[%s185] sm:$0xf]
        %200 = vst [vmem:[#allocation1] ss:$2 sm:$0xff] %v197
        %v201 = vld.sshfl [vmem:[#allocation1] sm:$0xff pattern:$0x75316420]
        %v202 = vld.sshfl [vmem:[#allocation1 + $0x8] sm:$0xff pattern:$0x75316420]
        %vm205 = vcmask 1043456
        %v206 = vsel %vm205, %v201, 0.0
        %v207 = vsel %vm205, %v202, 0.0
        %v208 = vadd.f32 %v206, %v207
        %209 = vadd.xlane.f32.xlu0 %v208
        %v210 = vpop.xlane.xlu0 %209
        %v211 = vadd.f32 %v198, %v210
        %vm212 = vcmask 3072
        %213 = vst.msk [vmem:[%s185] sm:$0xf] %vm212, %v211
        %v214 = vld [vmem:[%s189] sm:$0xf]
        %v215 = vmul.f32 %v197, %v197
        %217 = vst [vmem:[#allocation1] ss:$2 sm:$0xff] %v215
        %v218 = vld.sshfl [vmem:[#allocation1] sm:$0xff pattern:$0x75316420]
        %v219 = vld.sshfl [vmem:[#allocation1 + $0x8] sm:$0xff pattern:$0x75316420]
        %v222 = vsel %vm205, %v218, 0.0
        %v223 = vsel %vm205, %v219, 0.0
        %v224 = vadd.f32 %v222, %v223
        %225 = vadd.xlane.f32.xlu0 %v224
        %v226 = vpop.xlane.xlu0 %225
        %v227 = vadd.f32 %v214, %v226
        %228 = vst.msk [vmem:[%s189] sm:$0xf] %vm212, %v227
        %p229 = scmp.lt.s32.totalorder %s21, 1
        %s230 = scalar_select %p229, %s21, 1
        %s231 = smul.addr %s230, 4
        %s232 = scalar_lea.vmem %s1, %s231
        %p233 = scmp.lt.s32.totalorder %s21, 1
        %s234 = scalar_select %p233, %s21, 1
        %s235 = smul.addr %s234, 4
        %s236 = scalar_lea.vmem %s2, %s235
        // Predicated region
        $region33: #{tpu_custom_call.1} parent=23 // pred_check
          %p237 = pneg %p75
        $region34: #{tpu_custom_call.1} parent=23 // pred_check_branch
          %239 = sbr.rel (%p237) target = $region36
        $region35: #{tpu_custom_call.1} parent=23 // pred_region
          _
        $region36: #{tpu_custom_call.1} parent=23 // pred_fallthru
          _
        // Predicated region
        $region37: #{tpu_custom_call.1} parent=23 // pred_check
          %p240 = pneg %p101
        $region38: #{tpu_custom_call.1} parent=23 // pred_check_branch
          %242 = sbr.rel (%p240) target = $region40
        $region39: #{tpu_custom_call.1} parent=23 // pred_region
          _
        $region40: #{tpu_custom_call.1} parent=23 // pred_fallthru
          _
      $region24: #{tpu_custom_call.1} parent=5 // pred_fallthru
        _
      %p243 = scmp.le.s32.totalorder 2, %s12
      // Predicated region
      $region41: #{tpu_custom_call.1} parent=5 // pred_check
        %p244 = pneg %p243
      $region42: #{tpu_custom_call.1} parent=5 // pred_check_branch
        %246 = sbr.rel (%p244) target = $region44
      $region43: #{tpu_custom_call.1} parent=5 // pred_region
        %s247 = ssub.s32 %s12, 2
        // Predicated region
        $region45: #{tpu_custom_call.1} parent=43 // pred_check
          %p248 = pneg %p81
        $region46: #{tpu_custom_call.1} parent=43 // pred_check_branch
          %250 = sbr.rel (%p248) target = $region48
        $region47: #{tpu_custom_call.1} parent=43 // pred_region
          %p251 = scmp.lt.s32.totalorder %s23, 1
          %s252 = scalar_select %p251, %s23, 1
          %s253 = smul.addr %s252, 4
          %s254 = scalar_lea.vmem %s1, %s253
        $region48: #{tpu_custom_call.1} parent=43 // pred_fallthru
          _
        // Predicated region
        $region49: #{tpu_custom_call.1} parent=43 // pred_check
          %p255 = pneg %p107
        $region50: #{tpu_custom_call.1} parent=43 // pred_check_branch
          %257 = sbr.rel (%p255) target = $region52
        $region51: #{tpu_custom_call.1} parent=43 // pred_region
          %p258 = scmp.lt.s32.totalorder %s23, 1
          %s259 = scalar_select %p258, %s23, 1
          %s260 = smul.addr %s259, 4
          %s261 = scalar_lea.vmem %s2, %s260
        $region52: #{tpu_custom_call.1} parent=43 // pred_fallthru
          _
      $region44: #{tpu_custom_call.1} parent=5 // pred_fallthru
        _
    $region6: #{tpu_custom_call.1} parent=1 // loop_footer
      %s16 = sadd.s32 1, %s12
    $region7: #{tpu_custom_call.1} parent=1 // loop_footer_branch
      %11 = sbr.rel target = $region3
    $region8: #{tpu_custom_call.1} parent=1 // loop_exit
      _
    %262 = vsyncpa [#allocation3], 1
    %s263 = scalar_lea.sflag [#allocation3], 1
    %264 = vsyncpa %s263, 1

</llo_original>
